<compile_context>
chip_gen: v7x
topology: tpu7x:2x2x1
jax: 0.10.0
libtpu: 0.0.40
codegen_flags: <defaults>
</compile_context>

<pallas_src>
import functools

import jax
import jax.numpy as jnp
import numpy as np
from jax import lax
from jax.experimental import pallas as pl
from jax.experimental.pallas import tpu as pltpu

MARGIN = 0.6        # module default
BAND_LO_OFF = 0.05  # selection band is (margin + 0.05, 0.99)
BAND_HI = 0.99


# ---------------------------------------------------------------------------
# Helpers
# ---------------------------------------------------------------------------
def _vmem_budget_bytes():
    """~75% of physical VMEM: headroom for Mosaic internals / double buffers."""
    try:
        cap = int(pltpu.get_tpu_info().vmem_capacity_bytes)
    except Exception:
        cap = 64 << 20            # conservative fallback: v7x per-core VMEM
    return (cap * 3) // 4         # <= ~48 MiB on v7x, ~96 MiB on v5e/v6e


def _pick_tile(dim, candidates):
    for c in candidates:
        if dim >= c and dim % c == 0:
            return c
    return dim  # fallback: whole dim (no padding path; see correctness notes)


def _bspec(shape, index_map, buffers=None):
    """BlockSpec, optionally with deeper multi-buffering when supported."""
    if buffers is not None:
        try:
            return pl.BlockSpec(shape, index_map, pipeline_mode=pl.Buffered(buffers))
        except Exception:
            pass
    return pl.BlockSpec(shape, index_map)


# ---------------------------------------------------------------------------
# Kernel 1: row-wise L2 normalization + per-tile column sum-of-squares.
# ---------------------------------------------------------------------------
def _row_normalize_kernel(x_ref, y_ref, colsq_ref):
    x = x_ref[...].astype(jnp.float32)
    # Faithful to the module's custom `normalize` (no eps): an all-zero row
    # yields inf/NaN exactly as x.div(norm) does in PyTorch.
    y = x * lax.rsqrt(jnp.sum(x * x, axis=1, keepdims=True))
    y_ref[...] = y.astype(y_ref.dtype)
    # Per-tile partial; the (n_tiles, D) reduction + rsqrt happens in the
    # wrapper so this grid axis stays fully "parallel" (v7x dual-core safe).
    colsq_ref[...] = jnp.sum(y * y, axis=0, keepdims=True)


# ---------------------------------------------------------------------------
# Shared epilogue: masked band reduction on one (td, td) sim tile.
# ---------------------------------------------------------------------------
def _band_reduce_and_store(sim, same_tile, out_ref, *, margin, band_lo, band_hi):
    mask_f = jnp.logical_and(sim > band_lo, sim < band_hi).astype(jnp.float32)
    d = jnp.maximum(sim - margin, 0.0)
    # Off-diagonal D-tile pairs stand for both the (i, j) and (j, i) blocks of
    # the symmetric sim matrix -> weight 2; diagonal tile pairs weight 1.
    w = jnp.where(same_tile, 1.0, 2.0)
    num = jnp.sum(d * d * mask_f) * w
    cnt = jnp.sum(mask_f) * w
    rows = lax.broadcasted_iota(jnp.int32, out_ref.shape, 1)
    out_ref[...] = jnp.where(rows == 0, num, cnt)     # row 0 = num, row 1 = cnt


# ---------------------------------------------------------------------------
# Kernel 2a (primary): full-K Gram per pair (no contraction grid axis).
# ---------------------------------------------------------------------------
def _gram_masked_fullk_kernel(pair_i_ref, pair_j_ref,        # scalar prefetch
                              yi_ref, yj_ref, ri_ref, rj_ref,
                              out_ref,
                              *, margin, band_lo, band_hi, mxu_dtype):
    p = pl.program_id(0)
    # Column scaling folded into the operands (lane-wise broadcast, natural
    # layout) -> the single K=N dot produces the normalized sim tile directly.
    zi = (yi_ref[...].astype(jnp.float32) * ri_ref[...]).astype(mxu_dtype)
    zj = (yj_ref[...].astype(jnp.float32) * rj_ref[...]).astype(mxu_dtype)
    # zi^T @ zj : contract dim 0 of both operands on the MXU (no transpose op).
    g = lax.dot_general(zi, zj, (((0,), (0,)), ((), ())),
                        preferred_element_type=jnp.float32)
    _band_reduce_and_store(jnp.abs(g), pair_i_ref[p] == pair_j_ref[p], out_ref,
                           margin=margin, band_lo=band_lo, band_hi=band_hi)


# ---------------------------------------------------------------------------
# Kernel 2b (fallback for very large N): k-tiled Gram with f32 accumulator.
# ---------------------------------------------------------------------------
def _gram_masked_tiled_kernel(pair_i_ref, pair_j_ref,        # scalar prefetch
                              yi_ref, yj_ref, ricol_ref, rjrow_ref,
                              out_ref, acc_ref,
                              *, margin, band_lo, band_hi, mxu_dtype):
    p = pl.program_id(0)
    k = pl.program_id(1)

    @pl.when(k == 0)
    def _():
        acc_ref[...] = jnp.zeros_like(acc_ref)

    acc_ref[...] += lax.dot_general(
        yi_ref[...].astype(mxu_dtype), yj_ref[...].astype(mxu_dtype),
        (((0,), (0,)), ((), ())), preferred_element_type=jnp.float32)

    @pl.when(k == pl.num_programs(1) - 1)
    def _():
        # Column scaling applied once, after f32 accumulation:
        # ricol (td, 1) sublane-broadcast, rjrow (1, td) lane-broadcast.
        sim = jnp.abs(acc_ref[...]) * ricol_ref[...] * rjrow_ref[...]
        _band_reduce_and_store(sim, pair_i_ref[p] == pair_j_ref[p], out_ref,
                               margin=margin, band_lo=band_lo, band_hi=band_hi)


# ---------------------------------------------------------------------------
# Wrapper
# ---------------------------------------------------------------------------
def decor_loss(inputs, targets=None, margin=MARGIN, *, mxu_bf16=None,
               max_k_tile=None):
    """Pallas-backed DecorLoss.forward. `targets` is unused (as in PyTorch)."""
    # TODO(synk): the PyTorch forward only defines `sim_big` inside a
    # `np.random.randint(4) == 1` branch (NameError otherwise); we always take
    # the masked-selection path, i.e. the only well-defined code path.
    x = jnp.asarray(inputs)
    N, D = x.shape
    x_isz = x.dtype.itemsize
    budget = _vmem_budget_bytes()

    # bf16 MXU operands only in the compute-heavy (large-batch) regime; for
    # small N the kernel is memory/epilogue-bound and f32 keeps the
    # (margin+0.05, 0.99) band membership faithful to the reference.
    if mxu_bf16 is None:
        mxu_bf16 = N >= 1024
    mxu_dtype = jnp.bfloat16 if mxu_bf16 else jnp.float32
    y_dtype = jnp.bfloat16 if mxu_bf16 else jnp.float32
    y_isz = jnp.dtype(y_dtype).itemsize

    # D tiling: 256/512-lane tiles feed the v6e/v7x MXU well and are also fine
    # on v5e's 128-wide MXU (multi-pass); fall back to D itself if nothing fits.
    td = _pick_tile(D, (512, 256, 128))
    n_d = D // td

    # ---- Kernel 1: row-normalize + per-tile column sum-of-squares ----------
    tn1_cands = [c for c in (2048, 1024, 512, 256, 128, 64, 32, 16, 8)
                 if c <= N and N % c == 0
                 and 2 * c * D * (x_isz + 4 + y_isz) + 2 * D * 4 <= budget]
    tn1 = tn1_cands[0] if tn1_cands else N
    n_n1 = N // tn1
    need1 = 2 * tn1 * D * (x_isz + 4 + y_isz) + 2 * D * 4
    vmem1 = int(min(budget, max(2 * need1, 32 << 20)))

    y, colsq = pl.pallas_call(
        _row_normalize_kernel,
        out_shape=(jax.ShapeDtypeStruct((N, D), y_dtype),
                   jax.ShapeDtypeStruct((n_n1, D), jnp.float32)),
        grid=(n_n1,),
        in_specs=[pl.BlockSpec((tn1, D), lambda i: (i, 0))],
        out_specs=(pl.BlockSpec((tn1, D), lambda i: (i, 0)),
                   pl.BlockSpec((1, D), lambda i: (i, 0))),
        compiler_params=pltpu.CompilerParams(
            dimension_semantics=("parallel",),
            vmem_limit_bytes=vmem1),
        cost_estimate=pl.CostEstimate(
            flops=int(5 * N * D), transcendentals=int(N),
            bytes_accessed=int(N * D * (x_isz + y_isz) + n_n1 * D * 4)),
    )(x)

    # 1 / ||column of y||_2 : tiny XLA reduction over the per-tile partials.
    rinv_row = lax.rsqrt(jnp.sum(colsq, axis=0, keepdims=True))       # (1, D)

    # ---- Kernel 2: upper-triangular tiled Gram + masked band reduction -----
    # i-major pair order => consecutive pairs share the same yi strip, so the
    # pipeline skips its re-DMA.
    pairs = [(i, j) for i in range(n_d) for j in range(i, n_d)]
    n_pairs = len(pairs)
    pair_i = jnp.asarray(np.array([p[0] for p in pairs], dtype=np.int32))
    pair_j = jnp.asarray(np.array([p[1] for p in pairs], dtype=np.int32))

    band_lo = float(margin) + BAND_LO_OFF

    fullk_need = (4 * N * td * y_isz            # yi + yj strips, double-buffered
                  + 2 * td * td * 4             # dot result / epilogue temps
                  + 4 * td * 4 + 4 * 2 * 128 * 4
                  + (1 << 20))                  # slack for Mosaic internals
    use_fullk = (max_k_tile is None or max_k_tile >= N) and fullk_need <= budget

    if use_fullk:
        kernel = functools.partial(_gram_masked_fullk_kernel,
                                   margin=float(margin), band_lo=band_lo,
                                   band_hi=BAND_HI, mxu_dtype=mxu_dtype)
        grid_spec = pltpu.PrefetchScalarGridSpec(
            num_scalar_prefetch=2,
            grid=(n_pairs,),
            in_specs=[
                pl.BlockSpec((N, td), lambda p, pi, pj: (0, pi[p])),
                pl.BlockSpec((N, td), lambda p, pi, pj: (0, pj[p])),
                pl.BlockSpec((1, td), lambda p, pi, pj: (0, pi[p])),
                pl.BlockSpec((1, td), lambda p, pi, pj: (0, pj[p])),
            ],
            out_specs=pl.BlockSpec((1, 2, 128), lambda p, pi, pj: (p, 0, 0)),
        )
        operands = (pair_i, pair_j, y, y, rinv_row, rinv_row)
        semantics = ("parallel",)
        vmem2 = int(min(budget, max(2 * fullk_need, 32 << 20)))
        flops2 = int(n_pairs * (2 * N * td * td + 4 * N * td + 12 * td * td))
        bytes2 = int(n_pairs * (2 * N * td * y_isz + 8 * td + 2 * 128 * 4))
    else:
        # Very large N: tile the contraction; target tn >= 256 when it fits.
        tn_cands = [c for c in (2048, 1024, 512, 256, 128, 64, 32, 16, 8)
                    if c <= N and N % c == 0]
        if max_k_tile is not None:
            tn_cands = [c for c in tn_cands if c <= max_k_tile]
        tn = None
        for c in tn_cands:
            if 6 * c * td * y_isz + td * td * 4 + (1 << 20) <= budget:
                tn = c
                break
        if tn is None:
            tn = N   # TODO(synk): no padding/masking fallback for awkward N.
        n_k = N // tn
        buffers = 3 if n_k >= 8 else None   # deeper pipelining only when many
                                            # short steps remain (perf review)
        rinv_col = jnp.reshape(rinv_row, (D, 1))

        kernel = functools.partial(_gram_masked_tiled_kernel,
                                   margin=float(margin), band_lo=band_lo,
                                   band_hi=BAND_HI, mxu_dtype=mxu_dtype)
        grid_spec = pltpu.PrefetchScalarGridSpec(
            num_scalar_prefetch=2,
            grid=(n_pairs, n_k),                       # contraction axis last
            in_specs=[
                _bspec((tn, td), lambda p, k, pi, pj: (k, pi[p]), buffers),
                _bspec((tn, td), lambda p, k, pi, pj: (k, pj[p]), buffers),
                pl.BlockSpec((td, 1), lambda p, k, pi, pj: (pi[p], 0)),
                pl.BlockSpec((1, td), lambda p, k, pi, pj: (0, pj[p])),
            ],
            out_specs=pl.BlockSpec((1, 2, 128), lambda p, k, pi, pj: (p, 0, 0)),
            scratch_shapes=[pltpu.VMEM((td, td), jnp.float32)],
        )
        operands = (pair_i, pair_j, y, y, rinv_col, rinv_row)
        semantics = ("parallel", "arbitrary")
        need2 = 6 * tn * td * y_isz + td * td * 4 + 4 * td * 4 + (1 << 20)
        vmem2 = int(min(budget, max(2 * need2, 32 << 20)))
        flops2 = int(n_pairs * (2 * N * td * td + 14 * td * td))
        bytes2 = int(n_pairs * (2 * N * td * y_isz + 8 * td + 2 * 128 * 4))

    partials = pl.pallas_call(
        kernel,
        out_shape=jax.ShapeDtypeStruct((n_pairs, 2, 128), jnp.float32),
        grid_spec=grid_spec,
        compiler_params=pltpu.CompilerParams(
            dimension_semantics=semantics,
            vmem_limit_bytes=vmem2),
        cost_estimate=pl.CostEstimate(
            flops=flops2, transcendentals=0, bytes_accessed=bytes2),
    )(*operands)

    num = jnp.sum(partials[:, 0, 0])
    cnt = jnp.sum(partials[:, 1, 0])
    # Mean over the masked selection; NaN if the band is empty (matches
    # torch.mean over an empty masked_select).
    return num / cnt


def decor_loss_ref(x, margin=MARGIN):
    """Pure numpy (float64) reference mirroring the PyTorch forward exactly."""
    x = np.asarray(x, dtype=np.float64)
    x = x / np.linalg.norm(x, axis=1, keepdims=True)
    xt = x.T
    xt = xt / np.linalg.norm(xt, axis=1, keepdims=True)
    sim = np.abs(xt @ xt.T)
    sel = sim[(sim > margin + BAND_LO_OFF) & (sim < BAND_HI)]
    if sel.size == 0:
        return np.float64("nan")
    return np.mean(np.clip(sel - margin, 0.0, None) ** 2)


if __name__ == "__main__":
    key = jax.random.PRNGKey(0)
    k1, k2, k3 = jax.random.split(key, 3)

    # --- Case 1: small batch, D = 768 (3 tiles of 256) -> full-K path -------
    N1, D1 = 16, 768
    x1 = jax.random.normal(k1, (N1, D1), dtype=jnp.float32)
    # Plant correlated feature pairs (within-tile and across D-tiles) so the
    # (0.65, 0.99) similarity band is comfortably non-empty and the symmetric
    # off-diagonal tile weighting is exercised.
    x1 = x1.at[:, 1].set(x1[:, 0] + 0.6 * x1[:, 1])          # tile-pair (0, 0)
    x1 = x1.at[:, 300].set(x1[:, 7] + 0.7 * x1[:, 300])      # tile-pair (0, 1)
    x1 = x1.at[:, 600].set(x1[:, 301] + 0.8 * x1[:, 600])    # tile-pair (1, 2)
    targets1 = jax.random.randint(k2, (N1,), 0, 4)           # unused, mirrors API

    loss1 = decor_loss(x1, targets1)
    jax.block_until_ready(loss1)
    np.testing.assert_allclose(np.asarray(loss1), decor_loss_ref(np.asarray(x1)),
                               rtol=1e-3, atol=1e-7)

    # --- Case 2: force the k-tiled fallback (contraction tiling) path -------
    N2, D2 = 256, 768
    x2 = jax.random.normal(k3, (N2, D2), dtype=jnp.float32)
    x2 = x2.at[:, 3].set(x2[:, 2] + 0.5 * x2[:, 3])          # tile-pair (0, 0)
    x2 = x2.at[:, 300].set(x2[:, 10] + 0.6 * x2[:, 300])     # tile-pair (0, 1)
    x2 = x2.at[:, 600].set(x2[:, 301] + 0.7 * x2[:, 600])    # tile-pair (1, 2)
    loss2 = decor_loss(x2, max_k_tile=64)                    # tn = 64, n_k = 4
    jax.block_until_ready(loss2)
    np.testing.assert_allclose(np.asarray(loss2), decor_loss_ref(np.asarray(x2)),
                               rtol=1e-3, atol=1e-7)

    print("KERNEL_OK")
</pallas_src>

<mosaic_0001>
module attributes {stable_mosaic.version = 11 : i64} {
  func.func @_row_normalize_kernel(%arg0: i32, %arg1: memref<16x768xf32, #tpu.memory_space<vmem>>, %arg2: memref<16x768xf32, #tpu.memory_space<vmem>>, %arg3: memref<1x768xf32, #tpu.memory_space<vmem>>) attributes {dimension_semantics = [#tpu.dimension_semantics<parallel>], iteration_bounds = array<i64: 1>, scalar_prefetch = 0 : i64, scratch_operands = 0 : i64, tpu.core_type = #tpu.core_type<tc>, window_params = [{transform_indices = @transform_0, window_bounds = array<i64: 16, 768>}, {transform_indices = @transform_1, window_bounds = array<i64: 16, 768>}, {transform_indices = @transform_2, window_bounds = array<i64: 1, 768>}]} {
    %c0 = arith.constant 0 : index
    %c0_0 = arith.constant 0 : index
    %0 = vector.load %arg1[%c0, %c0_0] : memref<16x768xf32, #tpu.memory_space<vmem>>, vector<16x768xf32>
    %1 = arith.mulf %0, %0 : vector<16x768xf32>
    %cst = arith.constant dense<0.000000e+00> : vector<16xf32>
    %2 = vector.multi_reduction <add>, %1, %cst [1] : vector<16x768xf32> to vector<16xf32>
    %3 = vector.shape_cast %2 : vector<16xf32> to vector<16x1xf32>
    %4 = math.rsqrt %3 : vector<16x1xf32>
    %5 = vector.broadcast %4 : vector<16x1xf32> to vector<16x768xf32>
    %6 = arith.mulf %0, %5 : vector<16x768xf32>
    %c0_1 = arith.constant 0 : index
    %c0_2 = arith.constant 0 : index
    %7 = vector.load %arg2[%c0_1, %c0_2] : memref<16x768xf32, #tpu.memory_space<vmem>>, vector<16x768xf32>
    tpu.vector_store %arg2[%c0_1, %c0_2], %6 {strides = array<i32>} : memref<16x768xf32, #tpu.memory_space<vmem>>, vector<16x768xf32>,
    %8 = arith.mulf %6, %6 : vector<16x768xf32>
    %cst_3 = arith.constant dense<0.000000e+00> : vector<768xf32>
    %9 = vector.multi_reduction <add>, %8, %cst_3 [0] : vector<16x768xf32> to vector<768xf32>
    %10 = vector.shape_cast %9 : vector<768xf32> to vector<1x768xf32>
    %c0_4 = arith.constant 0 : index
    %c0_5 = arith.constant 0 : index
    %11 = vector.load %arg3[%c0_4, %c0_5] : memref<1x768xf32, #tpu.memory_space<vmem>>, vector<1x768xf32>
    tpu.vector_store %arg3[%c0_4, %c0_5], %10 {strides = array<i32>} : memref<1x768xf32, #tpu.memory_space<vmem>>, vector<1x768xf32>,
    return
  }
  func.func @transform_0(%arg0: i32) -> (i32, i32) {
    %c0_i32 = arith.constant 0 : i32
    %c0_i32_0 = arith.constant 0 : i32
    return %arg0, %c0_i32 : i32, i32
  }
  func.func @transform_1(%arg0: i32) -> (i32, i32) {
    %c0_i32 = arith.constant 0 : i32
    %c0_i32_0 = arith.constant 0 : i32
    return %arg0, %c0_i32 : i32, i32
  }
  func.func @transform_2(%arg0: i32) -> (i32, i32) {
    %c0_i32 = arith.constant 0 : i32
    %c0_i32_0 = arith.constant 0 : i32
    return %arg0, %c0_i32 : i32, i32
  }
}

</mosaic_0001>

<llo_original>
// kernel: tpu_custom_call.1
$region0: #{tpu_custom_call.1}
  #allocation0 [shape = 'u32[]', space=smem, size = 0x4, offset = 0x4, fixed_abs, tag = 'smem constant byte address 0x4 - core index']
  #allocation1 [shape = 'u32[144,128]{1,0:T(1,128)}', space=vmem, size = 0x12000, scoped, tag = 'internal scratch']
  %s0 = inlined_call_operand.hbm [shape: f32[16,768], index: 0, kind: input, shape index: {}]
  %s1 = inlined_call_operand.hbm [shape: f32[16,768], index: 1, kind: output, shape index: {0}]
  %s2 = inlined_call_operand.hbm [shape: f32[1,768], index: 2, kind: output, shape index: {1}]
  %3 = xla_tuple %s1, %s2
  %s4 = sld [smem:[#allocation0]]
  $region26: #{tpu_custom_call.1} parent=0
    _
  %s6 = ssub.s32 1, %s4
  %s7 = scalar_select 0, %s6, %s4
  $region1: #{tpu_custom_call.1} parent=0
    #allocation2 [shape = 'u8[49152]{0}', space=vmem, size = 0xc000, scoped, tag = 'input window, operand 0, single buffered']
    #allocation3 [shape = 's32[1]{0}', space=sflag, size = 0x4, scoped, tag = 'scoped memory for tpu_custom_call.1']
    #allocation4 [shape = 's32[1]{0}', space=sflag, size = 0x4, scoped, tag = 'scoped memory for tpu_custom_call.1']
    #allocation5 [shape = 'u8[49152]{0}', space=vmem, size = 0xc000, scoped, tag = 'output window, operand 0, single buffered']
    #allocation6 [shape = 'u8[3072]{0}', space=vmem, size = 0xc00, scoped, tag = 'output window, operand 1, single buffered']
    #allocation7 [shape = 's32[1]{0}', space=sflag, size = 0x4, scoped, tag = 'scoped memory for tpu_custom_call.1']
    %8 = vsyncpa [#allocation3], 0
    %9 = vsyncpa [#allocation4], 0
    %10 = vsyncpa [#allocation7], 0
    // Predicated region
    $region2: #{tpu_custom_call.1} parent=1 // pred_check
      _
    $region3: #{tpu_custom_call.1} parent=1 // pred_check_branch
      %12 = sbr.rel (0) target = $region5
    $region4: #{tpu_custom_call.1} parent=1 // pred_region
      %s14 = ssub.s32 1536, 1536
      %15 = vsyncadd [#allocation3], %s14
      %s16 = sshll.u32 [#allocation2], 4
      %s17 = int_to_ptr.vmem [resolvable:$true] %s16
      %22 = dma.hbm_to_vmem [thread:$0]  %s0, 1536, %s17, [#allocation3], 768, 768, 48
    $region5: #{tpu_custom_call.1} parent=1 // pred_fallthru
      _
    // Predicated region
    $region6: #{tpu_custom_call.1} parent=1 // pred_check
      _
    $region7: #{tpu_custom_call.1} parent=1 // pred_check_branch
      %24 = sbr.rel (0) target = $region9
    $region8: #{tpu_custom_call.1} parent=1 // pred_region
      %25 = dma.done [#allocation3], 1536
    $region9: #{tpu_custom_call.1} parent=1 // pred_fallthru
      _
    %v26 = vld [vmem:[#allocation2] sm:$0xff]
    %v27 = vld [vmem:[#allocation2 + $0x8] sm:$0xff]
    %v28 = vld [vmem:[#allocation2 + $0x10] sm:$0xff]
    %v29 = vld [vmem:[#allocation2 + $0x18] sm:$0xff]
    %v30 = vld [vmem:[#allocation2 + $0x20] sm:$0xff]
    %v31 = vld [vmem:[#allocation2 + $0x28] sm:$0xff]
    %v32 = vld [vmem:[#allocation2 + $0x30] sm:$0xff]
    %v33 = vld [vmem:[#allocation2 + $0x38] sm:$0xff]
    %v34 = vld [vmem:[#allocation2 + $0x40] sm:$0xff]
    %v35 = vld [vmem:[#allocation2 + $0x48] sm:$0xff]
    %v36 = vld [vmem:[#allocation2 + $0x50] sm:$0xff]
    %v37 = vld [vmem:[#allocation2 + $0x58] sm:$0xff]
    %v38 = vmul.f32 %v26, %v26
    %v39 = vmul.f32 %v27, %v27
    %v40 = vmul.f32 %v28, %v28
    %v41 = vmul.f32 %v29, %v29
    %v42 = vmul.f32 %v30, %v30
    %v43 = vmul.f32 %v31, %v31
    %v44 = vmul.f32 %v32, %v32
    %v45 = vmul.f32 %v33, %v33
    %v46 = vmul.f32 %v34, %v34
    %v47 = vmul.f32 %v35, %v35
    %v48 = vmul.f32 %v36, %v36
    %v49 = vmul.f32 %v37, %v37
    %v50 = vadd.f32 %v38, %v39
    %v51 = vadd.f32 %v50, %v40
    %v52 = vadd.f32 %v51, %v41
    %v53 = vadd.f32 %v52, %v42
    %v54 = vadd.f32 %v53, %v43
    %55 = vadd.xlane.f32.xlu0 %v54
    %v56 = vpop.xlane.xlu0 %55
    %v57 = vadd.f32 %v44, %v45
    %v58 = vadd.f32 %v57, %v46
    %v59 = vadd.f32 %v58, %v47
    %v60 = vadd.f32 %v59, %v48
    %v61 = vadd.f32 %v60, %v49
    %62 = vadd.xlane.f32.xlu0 %v61
    %v63 = vpop.xlane.xlu0 %62
    %v64 = vrsqrt.pop %v56
    %v65 = vrsqrt.pop %v63
    %v66 = vmul.f32 %v26, %v64
    %v67 = vmul.f32 %v27, %v64
    %v68 = vmul.f32 %v28, %v64
    %v69 = vmul.f32 %v29, %v64
    %v70 = vmul.f32 %v30, %v64
    %v71 = vmul.f32 %v31, %v64
    %v72 = vmul.f32 %v32, %v65
    %v73 = vmul.f32 %v33, %v65
    %v74 = vmul.f32 %v34, %v65
    %v75 = vmul.f32 %v35, %v65
    %v76 = vmul.f32 %v36, %v65
    %v77 = vmul.f32 %v37, %v65
    %78 = vst [vmem:[#allocation5] sm:$0xff] %v66
    %79 = vst [vmem:[#allocation5 + $0x8] sm:$0xff] %v67
    %80 = vst [vmem:[#allocation5 + $0x10] sm:$0xff] %v68
    %81 = vst [vmem:[#allocation5 + $0x18] sm:$0xff] %v69
    %82 = vst [vmem:[#allocation5 + $0x20] sm:$0xff] %v70
    %83 = vst [vmem:[#allocation5 + $0x28] sm:$0xff] %v71
    %84 = vst [vmem:[#allocation5 + $0x30] sm:$0xff] %v72
    %85 = vst [vmem:[#allocation5 + $0x38] sm:$0xff] %v73
    %86 = vst [vmem:[#allocation5 + $0x40] sm:$0xff] %v74
    %87 = vst [vmem:[#allocation5 + $0x48] sm:$0xff] %v75
    %88 = vst [vmem:[#allocation5 + $0x50] sm:$0xff] %v76
    %89 = vst [vmem:[#allocation5 + $0x58] sm:$0xff] %v77
    %v90 = vmul.f32 %v66, %v66
    %v91 = vmul.f32 %v67, %v67
    %v92 = vmul.f32 %v68, %v68
    %v93 = vmul.f32 %v69, %v69
    %v94 = vmul.f32 %v70, %v70
    %v95 = vmul.f32 %v71, %v71
    %v96 = vmul.f32 %v72, %v72
    %v97 = vmul.f32 %v73, %v73
    %v98 = vmul.f32 %v74, %v74
    %v99 = vmul.f32 %v75, %v75
    %v100 = vmul.f32 %v76, %v76
    %v101 = vmul.f32 %v77, %v77
    %v102 = vadd.f32 %v90, %v96
    %v103 = vrot.slane %v102, 4
    %v104 = vadd.f32 %v102, %v103
    %v105 = vrot.slane %v104, 2
    %v106 = vadd.f32 %v104, %v105
    %v107 = vrot.slane %v106, 1
    %v108 = vadd.f32 %v106, %v107
    %v109 = vadd.f32 %v91, %v97
    %v110 = vrot.slane %v109, 4
    %v111 = vadd.f32 %v109, %v110
    %v112 = vrot.slane %v111, 2
    %v113 = vadd.f32 %v111, %v112
    %v114 = vrot.slane %v113, 1
    %v115 = vadd.f32 %v113, %v114
    %v116 = vadd.f32 %v92, %v98
    %v117 = vrot.slane %v116, 4
    %v118 = vadd.f32 %v116, %v117
    %v119 = vrot.slane %v118, 2
    %v120 = vadd.f32 %v118, %v119
    %v121 = vrot.slane %v120, 1
    %v122 = vadd.f32 %v120, %v121
    %v123 = vadd.f32 %v93, %v99
    %v124 = vrot.slane %v123, 4
    %v125 = vadd.f32 %v123, %v124
    %v126 = vrot.slane %v125, 2
    %v127 = vadd.f32 %v125, %v126
    %v128 = vrot.slane %v127, 1
    %v129 = vadd.f32 %v127, %v128
    %v130 = vadd.f32 %v94, %v100
    %v131 = vrot.slane %v130, 4
    %v132 = vadd.f32 %v130, %v131
    %v133 = vrot.slane %v132, 2
    %v134 = vadd.f32 %v132, %v133
    %v135 = vrot.slane %v134, 1
    %v136 = vadd.f32 %v134, %v135
    %v137 = vadd.f32 %v95, %v101
    %v138 = vrot.slane %v137, 4
    %v139 = vadd.f32 %v137, %v138
    %v140 = vrot.slane %v139, 2
    %v141 = vadd.f32 %v139, %v140
    %v142 = vrot.slane %v141, 1
    %v143 = vadd.f32 %v141, %v142
    %v150 = vcombine.low %v108, %v115
    %v151 = vcombine.low %v122, %v129
    %v152 = vcombine.low %v136, %v143
    %v154 = vunpack.c.l.s4 1966171168
    %v155 = vunpack.c.0.s8 %v154
    %v156 = vlaneseq
    %v157 = vshrl.u32 %v156, 7
    %v158 = vsub.s32 %v155, %v157
    %v159 = vrot.slane %v150, %v158
    %v161 = vunpack.c.l.s4 1966171168
    %v162 = vunpack.c.0.s8 %v161
    %v163 = vlaneseq
    %v164 = vshrl.u32 %v163, 7
    %v165 = vsub.s32 %v162, %v164
    %v166 = vrot.slane %v151, %v165
    %v168 = vunpack.c.l.s4 1966171168
    %v169 = vunpack.c.0.s8 %v168
    %v170 = vlaneseq
    %v171 = vshrl.u32 %v170, 7
    %v172 = vsub.s32 %v169, %v171
    %v173 = vrot.slane %v152, %v172
    %v174 = vcombine.low %v159, %v166
    %v176 = vunpack.c.l.s4 1966171168
    %v177 = vunpack.c.0.s8 %v176
    %v178 = vlaneseq
    %v179 = vshrl.u32 %v178, 7
    %v180 = vsub.s32 %v177, %v179
    %v181 = vrot.slane %v174, %v180
    %v183 = vunpack.c.l.s4 1966171168
    %v184 = vunpack.c.0.s8 %v183
    %v185 = vlaneseq
    %v186 = vshrl.u32 %v185, 7
    %v187 = vsub.s32 %v184, %v186
    %v188 = vrot.slane %v173, %v187
    %v189 = vcombine.low %v181, %v188
    %v191 = vlaneseq
    %vm192 = vcmp.ge.s32.totalorder %v191, 0
    %vm193 = vcmp.lt.s32.totalorder %v191, 768
    %vm194 = vmand %vm192, %vm193
    %195 = vst.msk [vmem:[#allocation6] sm:$0x3f] %vm194, %v189
    // Predicated region
    $region10: #{tpu_custom_call.1} parent=1 // pred_check
      _
    $region11: #{tpu_custom_call.1} parent=1 // pred_check_branch
      %197 = sbr.rel (0) target = $region13
    $region12: #{tpu_custom_call.1} parent=1 // pred_region
      %s199 = ssub.s32 1536, 1536
      %200 = vsyncadd [#allocation4], %s199
      %s201 = sshll.u32 [#allocation5], 4
      %s202 = int_to_ptr.vmem [resolvable:$true] %s201
      %207 = dma.vmem_to_hbm [thread:$0]  %s202, 1536, %s1, [#allocation4], 768, 768, 48
    $region13: #{tpu_custom_call.1} parent=1 // pred_fallthru
      _
    // Predicated region
    $region14: #{tpu_custom_call.1} parent=1 // pred_check
      _
    $region15: #{tpu_custom_call.1} parent=1 // pred_check_branch
      %209 = sbr.rel (0) target = $region17
    $region16: #{tpu_custom_call.1} parent=1 // pred_region
      %s211 = ssub.s32 96, 96
      %212 = vsyncadd [#allocation7], %s211
      %s214 = sshll.u32 [#allocation6], 4
      %s215 = int_to_ptr.vmem [resolvable:$true] %s214
      %217 = dma.vmem_to_hbm [thread:$0]  %s215, 96, %s2, [#allocation7]
    $region17: #{tpu_custom_call.1} parent=1 // pred_fallthru
      _
    // Predicated region
    $region18: #{tpu_custom_call.1} parent=1 // pred_check
      _
    $region19: #{tpu_custom_call.1} parent=1 // pred_check_branch
      %219 = sbr.rel (0) target = $region21
    $region20: #{tpu_custom_call.1} parent=1 // pred_region
      %220 = dma.done [#allocation4], 1536
    $region21: #{tpu_custom_call.1} parent=1 // pred_fallthru
      _
    // Predicated region
    $region22: #{tpu_custom_call.1} parent=1 // pred_check
      _
    $region23: #{tpu_custom_call.1} parent=1 // pred_check_branch
      %222 = sbr.rel (0) target = $region25
    $region24: #{tpu_custom_call.1} parent=1 // pred_region
      %223 = dma.done [#allocation7], 96
    $region25: #{tpu_custom_call.1} parent=1 // pred_fallthru
      _
    %224 = vsyncpa [#allocation3], 1
    %225 = vsyncpa [#allocation4], 1
    %226 = vsyncpa [#allocation7], 1

</llo_original>
